<compile_context>
chip_gen: v6e
topology: v6e:2x2x1
jax: 0.10.0
libtpu: 0.0.40
codegen_flags: <defaults>
</compile_context>

<pallas_src>
import functools

import jax
import jax.numpy as jnp
import numpy as np
from jax.experimental import pallas as pl
from jax.experimental.pallas import tpu as pltpu


def _round_up(x, m):
    return (x + m - 1) // m * m


# --------------------------------------------------------------------------------------
# Kernel
# --------------------------------------------------------------------------------------
def _dual_attn_kernel(q_ref, k_ref, v_ref,
                      wq_ref, bq_ref, wk_ref, bk_ref,
                      pre_mul_ref, pre_add_ref, post_mul_ref, post_add_ref,
                      sel_ref, p12_ref, wbt_ref, wbs_ref, rred_ref,
                      out_ref, *, window, operation):
    f32 = jnp.float32
    W = window
    pad = W // 2
    R = q_ref.shape[0]                                   # BB*S rows (batch folded in)

    q = q_ref[...].astype(f32)
    k = k_ref[...].astype(f32)
    v = v_ref[...].astype(f32)

    # fused projections: ONE MXU matmul each for q/k covers both layers and all heads
    qp = jnp.dot(q, wq_ref[...].astype(f32), preferred_element_type=f32) + bq_ref[...]
    kp = jnp.dot(k, wk_ref[...].astype(f32), preferred_element_type=f32) + bk_ref[...]

    # banded q*k products / shifted values for all diagonals, packed along lanes
    qk_parts, v_parts = [], []
    for d in range(W + 1):                               # W is a tiny static hyperparam
        off = d - pad
        if off == 0:
            kp_d, v_d = kp, v
        else:
            shift = (-off) % R
            kp_d = pltpu.roll(kp, shift, 0)              # XLU sublane rotate
            v_d = pltpu.roll(v, shift, 0)
        qk_parts.append(qp * kp_d)
        v_parts.append(v_d)
    qk_all = jnp.concatenate(qk_parts, axis=1)           # (R, (W+1)*2*H*E)
    v_all = jnp.concatenate(v_parts, axis=1)             # (R, (W+1)*H*O)

    # ONE fat matmul -> per-(diag, layer, head) scores; single-tanh activation + mask
    scores = jnp.dot(qk_all, sel_ref[...], preferred_element_type=f32)     # (R, L2)
    xs = scores * pre_mul_ref[...] + pre_add_ref[...]
    a = jnp.tanh(xs) * post_mul_ref[...] + post_add_ref[...]               # masked bands

    # attn1 | attn2 lane permutation (lane = d*H + h within each half)
    attn12 = jnp.dot(a, p12_ref[...], preferred_element_type=f32)          # (R, 2*(W+1)*H)

    rred = rred_ref[...]
    if operation == "sub":
        # linearity: out1 - out2 == ((a @ (Bt - Bs)) * v_all) @ rred  -> one fused path
        wb = wbt_ref[...] - wbs_ref[...]
        out_p = jnp.dot(jnp.dot(a, wb, preferred_element_type=f32) * v_all,
                        rred, preferred_element_type=f32)
    else:  # "mul"
        o1 = jnp.dot(jnp.dot(a, wbt_ref[...], preferred_element_type=f32) * v_all,
                     rred, preferred_element_type=f32)
        o2 = jnp.dot(jnp.dot(a, wbs_ref[...], preferred_element_type=f32) * v_all,
                     rred, preferred_element_type=f32)
        out_p = o1 * o2

    # single lane-dense (128-padded) store: [attn1 | attn2 | out | zero pad]
    out_ref[...] = jnp.concatenate([attn12, out_p], axis=1)


# --------------------------------------------------------------------------------------
# Host-side constant / weight fusion
# --------------------------------------------------------------------------------------
def _build_constants(params, *, H, E, O, W, S, BB, OUT_W):
    f32 = jnp.float32
    pad = W // 2
    HE, HO = H * E, H * O
    G = 2 * H                       # (layer, head) groups, g = layer*H + h
    L2 = (W + 1) * G                # score lanes, lane = d*G + g
    LV = (W + 1) * HO               # value lanes, lane = d*HO + h*O + o
    AH = (W + 1) * H
    R = BB * S

    # fused head-shared Linear weights of BOTH layers (block-diagonal over heads)
    eye_h = jnp.eye(H, dtype=f32)
    bd = lambda w: jnp.kron(eye_h, w.astype(f32).T)              # (HE, HE)
    wq = jnp.concatenate([bd(params["wq1"]), bd(params["wq2"])], axis=1)   # (HE, 2HE)
    wk = jnp.concatenate([bd(params["wk1"]), bd(params["wk2"])], axis=1)
    bq = jnp.concatenate([jnp.tile(params["bq1"].astype(f32), H),
                          jnp.tile(params["bq2"].astype(f32), H)])[None]   # (1, 2HE)
    bk = jnp.concatenate([jnp.tile(params["bk1"].astype(f32), H),
                          jnp.tile(params["bk2"].astype(f32), H)])[None]

    # score reduction: sums the E embed lanes of every (diag, layer, head) group
    sel = (np.arange(2 * HE)[:, None] // E == np.arange(G)[None, :]).astype(np.float32)
    sel_all = jnp.asarray(np.kron(np.eye(W + 1, dtype=np.float32), sel))   # ((W+1)2HE, L2)

    # ocpe bias per score lane (lane = d*G + g)
    ocpe = jnp.concatenate([params["ocpe1"].astype(f32),
                            params["ocpe2"].astype(f32)], axis=1)          # (W+1, G)
    ocpe_row = ocpe.reshape(1, L2)

    # single-tanh activation: tanh lanes -> tanh(x); sigmoid lanes -> 0.5*tanh(0.5x)+0.5
    g_lane = np.arange(L2) % G
    is_tanh = g_lane < H
    m_row = np.where(is_tanh, 1.0, 0.5).astype(np.float32)[None, :]        # pre/post scale
    a_row = np.where(is_tanh, 0.0, 0.5).astype(np.float32)[None, :]        # post offset
    pre_mul = jnp.asarray(m_row)
    pre_add = ocpe_row * pre_mul            # (scores + ocpe)*m == scores*m + ocpe*m

    # validity mask on the LOCAL row index (so cross-batch roll wrap is zeroed);
    # act(zero_value) is exactly 0.0 for both layers (tanh(0)=0, sigmoid(-1000)->0 in f32)
    local = np.arange(R) % S
    d_lane = np.arange(L2) // G
    tgt = local[:, None] + d_lane[None, :] - pad
    vmask = ((tgt >= 0) & (tgt < S)).astype(np.float32)                    # (R, L2)
    post_mul = jnp.asarray(vmask * m_row)
    post_add = jnp.asarray(vmask * a_row)

    # lane permutation: score lane d*G+g -> attn1 col d*H+h  |  attn2 col AH+d*H+h
    p12 = np.zeros((L2, 2 * AH), np.float32)
    lanes = np.arange(L2)
    d_of, g_of = lanes // G, lanes % G
    cols = np.where(g_of < H, d_of * H + g_of, AH + d_of * H + (g_of - H))
    p12[lanes, cols] = 1.0
    p12 = jnp.asarray(p12)

    # value-path broadcast: score lane -> its head's O value lanes, one matrix per layer
    bexp_t = np.zeros((G, HO), np.float32)
    bexp_s = np.zeros((G, HO), np.float32)
    for g in range(G):
        h = g % H
        (bexp_t if g < H else bexp_s)[g, h * O:(h + 1) * O] = 1.0
    eye_d = np.eye(W + 1, dtype=np.float32)
    wbt = jnp.asarray(np.kron(eye_d, bexp_t))                              # (L2, LV)
    wbs = jnp.asarray(np.kron(eye_d, bexp_s))

    # value-path reduction over (d, h), zero-padded to the lane-dense slab width
    rred = np.zeros((LV, OUT_W - 2 * AH), np.float32)
    rred[np.arange(LV), np.arange(LV) % O] = 1.0
    rred = jnp.asarray(rred)

    return dict(wq=wq, bq=bq, wk=wk, bk=bk, pre_mul=pre_mul, pre_add=pre_add,
                post_mul=post_mul, post_add=post_add, sel=sel_all, p12=p12,
                wbt=wbt, wbs=wbs, rred=rred)


def _choose_batch_block(batch, seq, row_cap=512):
    """Largest legal batch block so each grid step is a fat (BB*S, .) row slab."""
    divs = [d for d in range(1, batch + 1) if batch % d == 0]
    legal = [d for d in divs if d * seq <= row_cap and ((d * seq) % 8 == 0 or d == batch)]
    if not legal:
        return batch                     # single fat step; blocks equal full dims
    bb = max(legal)
    if bb == batch and batch >= 2:
        # v7x megacore: keep >=2 parallel grid steps when the blocks stay fat anyway
        smaller = [d for d in legal if d < batch and d * seq >= 128]
        if smaller:
            return max(smaller)
    return bb


# --------------------------------------------------------------------------------------
# Wrapper
# --------------------------------------------------------------------------------------
@functools.partial(jax.jit,
                   static_argnames=("num_heads", "embed_dim", "num_outputs",
                                    "window", "operation"))
def operation_on_attention_layers(q_in, k_in, v_in, params, *,
                                  num_heads, embed_dim, num_outputs, window,
                                  operation="sub"):
    """q_in, k_in: (B, S, H*E); v_in: (B, S, H*O). Returns ({'attn1','attn2'}, out)."""
    B, S, _ = q_in.shape
    H, E, O, W = num_heads, embed_dim, num_outputs, window
    HE, HO = H * E, H * O
    AH = (W + 1) * H
    L2 = (W + 1) * 2 * H
    LQK = (W + 1) * 2 * HE
    LV = (W + 1) * HO

    BB = _choose_batch_block(B, S)
    NB = B // BB
    R = BB * S
    OUT_W = max(128, _round_up(2 * AH + O, 128))

    c = _build_constants(params, H=H, E=E, O=O, W=W, S=S, BB=BB, OUT_W=OUT_W)

    # batch folded into the row (sublane) axis: metadata-only reshapes, native dtypes
    q2 = q_in.reshape(B * S, HE)
    k2 = k_in.reshape(B * S, HE)
    v2 = v_in.reshape(B * S, HO)

    row_spec = lambda cols: pl.BlockSpec((R, cols), lambda i: (i, 0))
    const_spec = lambda shape: pl.BlockSpec(shape, lambda i: (0, 0))

    in_specs = [
        row_spec(HE), row_spec(HE), row_spec(HO),
        const_spec((HE, 2 * HE)), const_spec((1, 2 * HE)),
        const_spec((HE, 2 * HE)), const_spec((1, 2 * HE)),
        const_spec((1, L2)), const_spec((1, L2)),
        const_spec((R, L2)), const_spec((R, L2)),
        const_spec((LQK, L2)), const_spec((L2, 2 * AH)),
        const_spec((L2, LV)), const_spec((L2, LV)),
        const_spec((LV, OUT_W - 2 * AH)),
    ]
    out_spec = pl.BlockSpec((R, OUT_W), lambda i: (i, 0))

    # explicit scoped-VMEM budget (double-buffered blocks + constants + intermediates)
    blk_bytes = 4 * R * (2 * HE + HO + OUT_W)
    const_bytes = 4 * (2 * 2 * HE * HE + 4 * HE + 2 * L2 + 2 * R * L2
                       + LQK * L2 + L2 * (2 * AH + 2 * LV) + LV * OUT_W)
    interm_bytes = 4 * R * (2 * (LQK + LV) + 4 * L2 + 2 * OUT_W + 4 * HE)
    vmem_limit = int(min(max(2 * (blk_bytes + const_bytes) + interm_bytes + (16 << 20),
                             32 << 20), 100 << 20))

    kernel = functools.partial(_dual_attn_kernel, window=W, operation=operation)
    slab = pl.pallas_call(
        kernel,
        grid_spec=pltpu.PrefetchScalarGridSpec(
            num_scalar_prefetch=0, grid=(NB,),
            in_specs=in_specs, out_specs=out_spec),
        out_shape=jax.ShapeDtypeStruct((B * S, OUT_W), jnp.float32),
        compiler_params=pltpu.CompilerParams(
            dimension_semantics=("parallel",),
            vmem_limit_bytes=vmem_limit),
    )(q2, k2, v2, c["wq"], c["bq"], c["wk"], c["bk"],
      c["pre_mul"], c["pre_add"], c["post_mul"], c["post_add"],
      c["sel"], c["p12"], c["wbt"], c["wbs"], c["rred"])

    # split the packed lane-dense slab (cheap XLA slices / metadata reshapes)
    slab = slab.reshape(B, S, OUT_W)
    attn1 = slab[..., :AH].reshape(B, S, W + 1, H)
    attn2 = slab[..., AH:2 * AH].reshape(B, S, W + 1, H)
    out = slab[..., 2 * AH:2 * AH + O]
    return {"attn1": attn1, "attn2": attn2}, out


# ---------------- pure-JAX reference (for correctness check) ----------------
def _reference(q_in, k_in, v_in, params, *, num_heads, embed_dim, num_outputs, window,
               operation="sub"):
    B, S, _ = q_in.shape
    H, E, O, W = num_heads, embed_dim, num_outputs, window
    pad = W // 2
    q = q_in.reshape(B, S, H, E)
    k = k_in.reshape(B, S, H, E)
    v = v_in.reshape(B, S, H, O)

    def one(wq, bq, wk, bk, ocpe, act, zero_value):
        qp = jnp.einsum("bshe,fe->bshf", q, wq) + bq
        kp = jnp.einsum("bshe,fe->bshf", k, wk) + bk
        s_full = jnp.einsum("bihe,bjhe->bijh", qp, kp)              # (B,S,S,H)
        i = jnp.arange(S)[:, None]
        j = jnp.arange(S)[None, :]
        within = jnp.abs(i - j) <= pad                              # (S,S)
        ocpe_full = jnp.where(within[..., None],
                              ocpe[jnp.clip(j - i + pad, 0, W)], 0.0)
        s_full = jnp.where(within[None, :, :, None], s_full + ocpe_full, zero_value)
        attn_full = act(s_full)
        out = jnp.einsum("bijh,bjho->bio",
                         jnp.where(within[None, :, :, None], attn_full, 0.0), v)
        d = jnp.arange(W + 1)[None, :]
        jdx = jnp.arange(S)[:, None] + d - pad                      # (S,W+1)
        valid = (jdx >= 0) & (jdx < S)
        band = attn_full[:, jnp.arange(S)[:, None], jnp.clip(jdx, 0, S - 1)]  # (B,S,W+1,H)
        band = jnp.where(valid[None, :, :, None], band,
                         act(jnp.asarray(zero_value, jnp.float32)))
        return band, out

    a1, o1 = one(params["wq1"], params["bq1"], params["wk1"], params["bk1"],
                 params["ocpe1"], jnp.tanh, 0.0)
    a2, o2 = one(params["wq2"], params["bq2"], params["wk2"], params["bk2"],
                 params["ocpe2"], jax.nn.sigmoid, -1000.0)
    out = o1 - o2 if operation == "sub" else o1 * o2
    return {"attn1": a1, "attn2": a2}, out


if __name__ == "__main__":
    B, S = 2, 16
    H, E, O, W = 2, 8, 4, 4          # num_heads, embed_dim, num_outputs, window (even)

    key = jax.random.PRNGKey(0)
    keys = jax.random.split(key, 13)
    q_in = jax.random.normal(keys[0], (B, S, H * E), jnp.float32)
    k_in = jax.random.normal(keys[1], (B, S, H * E), jnp.float32)
    v_in = jax.random.normal(keys[2], (B, S, H * O), jnp.float32)

    scale = 1.0 / np.sqrt(E)
    params = dict(
        wq1=jax.random.normal(keys[3], (E, E), jnp.float32) * scale,
        bq1=jax.random.normal(keys[4], (E,), jnp.float32) * 0.1,
        wk1=jax.random.normal(keys[5], (E, E), jnp.float32) * scale,
        bk1=jax.random.normal(keys[6], (E,), jnp.float32) * 0.1,
        # module inits ocpe to zeros; use small random values here to exercise the path
        ocpe1=jax.random.normal(keys[7], (W + 1, H), jnp.float32) * 0.1,
        wq2=jax.random.normal(keys[8], (E, E), jnp.float32) * scale,
        bq2=jax.random.normal(keys[9], (E,), jnp.float32) * 0.1,
        wk2=jax.random.normal(keys[10], (E, E), jnp.float32) * scale,
        bk2=jax.random.normal(keys[11], (E,), jnp.float32) * 0.1,
        ocpe2=jax.random.normal(keys[12], (W + 1, H), jnp.float32) * 0.1,
    )

    attns, out = operation_on_attention_layers(
        q_in, k_in, v_in, params,
        num_heads=H, embed_dim=E, num_outputs=O, window=W, operation="sub")
    jax.block_until_ready(out)

    attns_ref, out_ref = _reference(
        q_in, k_in, v_in, params,
        num_heads=H, embed_dim=E, num_outputs=O, window=W, operation="sub")

    np.testing.assert_allclose(np.asarray(attns["attn1"]), np.asarray(attns_ref["attn1"]),
                               rtol=1e-3, atol=1e-3)
    np.testing.assert_allclose(np.asarray(attns["attn2"]), np.asarray(attns_ref["attn2"]),
                               rtol=1e-3, atol=1e-3)
    np.testing.assert_allclose(np.asarray(out), np.asarray(out_ref),
                               rtol=1e-3, atol=1e-3)

    print("KERNEL_OK")
</pallas_src>

<mosaic_0001>
module attributes {stable_mosaic.version = 11 : i64} {
  func.func @_dual_attn_kernel(%arg0: i32, %arg1: memref<32x16xf32, #tpu.memory_space<vmem>>, %arg2: memref<32x16xf32, #tpu.memory_space<vmem>>, %arg3: memref<32x8xf32, #tpu.memory_space<vmem>>, %arg4: memref<16x32xf32, #tpu.memory_space<vmem>>, %arg5: memref<1x32xf32, #tpu.memory_space<vmem>>, %arg6: memref<16x32xf32, #tpu.memory_space<vmem>>, %arg7: memref<1x32xf32, #tpu.memory_space<vmem>>, %arg8: memref<1x20xf32, #tpu.memory_space<vmem>>, %arg9: memref<1x20xf32, #tpu.memory_space<vmem>>, %arg10: memref<32x20xf32, #tpu.memory_space<vmem>>, %arg11: memref<32x20xf32, #tpu.memory_space<vmem>>, %arg12: memref<160x20xf32, #tpu.memory_space<vmem>>, %arg13: memref<20x20xf32, #tpu.memory_space<vmem>>, %arg14: memref<20x40xf32, #tpu.memory_space<vmem>>, %arg15: memref<20x40xf32, #tpu.memory_space<vmem>>, %arg16: memref<40x108xf32, #tpu.memory_space<vmem>>, %arg17: memref<32x128xf32, #tpu.memory_space<vmem>>) attributes {dimension_semantics = [#tpu.dimension_semantics<parallel>], iteration_bounds = array<i64: 1>, scalar_prefetch = 0 : i64, scratch_operands = 0 : i64, tpu.core_type = #tpu.core_type<tc>, window_params = [{transform_indices = @transform_0, window_bounds = array<i64: 32, 16>}, {transform_indices = @transform_1, window_bounds = array<i64: 32, 16>}, {transform_indices = @transform_2, window_bounds = array<i64: 32, 8>}, {pipeline_mode = #tpu.pipeline_mode<synchronous>, transform_indices = @transform_3, window_bounds = array<i64: 16, 32>}, {pipeline_mode = #tpu.pipeline_mode<synchronous>, transform_indices = @transform_4, window_bounds = array<i64: 1, 32>}, {pipeline_mode = #tpu.pipeline_mode<synchronous>, transform_indices = @transform_5, window_bounds = array<i64: 16, 32>}, {pipeline_mode = #tpu.pipeline_mode<synchronous>, transform_indices = @transform_6, window_bounds = array<i64: 1, 32>}, {pipeline_mode = #tpu.pipeline_mode<synchronous>, transform_indices = @transform_7, window_bounds = array<i64: 1, 20>}, {pipeline_mode = #tpu.pipeline_mode<synchronous>, transform_indices = @transform_8, window_bounds = array<i64: 1, 20>}, {pipeline_mode = #tpu.pipeline_mode<synchronous>, transform_indices = @transform_9, window_bounds = array<i64: 32, 20>}, {pipeline_mode = #tpu.pipeline_mode<synchronous>, transform_indices = @transform_10, window_bounds = array<i64: 32, 20>}, {pipeline_mode = #tpu.pipeline_mode<synchronous>, transform_indices = @transform_11, window_bounds = array<i64: 160, 20>}, {pipeline_mode = #tpu.pipeline_mode<synchronous>, transform_indices = @transform_12, window_bounds = array<i64: 20, 20>}, {pipeline_mode = #tpu.pipeline_mode<synchronous>, transform_indices = @transform_13, window_bounds = array<i64: 20, 40>}, {pipeline_mode = #tpu.pipeline_mode<synchronous>, transform_indices = @transform_14, window_bounds = array<i64: 20, 40>}, {pipeline_mode = #tpu.pipeline_mode<synchronous>, transform_indices = @transform_15, window_bounds = array<i64: 40, 108>}, {transform_indices = @transform_16, window_bounds = array<i64: 32, 128>}]} {
    %c0 = arith.constant 0 : index
    %c0_0 = arith.constant 0 : index
    %0 = vector.load %arg1[%c0, %c0_0] : memref<32x16xf32, #tpu.memory_space<vmem>>, vector<32x16xf32>
    %c0_1 = arith.constant 0 : index
    %c0_2 = arith.constant 0 : index
    %1 = vector.load %arg2[%c0_1, %c0_2] : memref<32x16xf32, #tpu.memory_space<vmem>>, vector<32x16xf32>
    %c0_3 = arith.constant 0 : index
    %c0_4 = arith.constant 0 : index
    %2 = vector.load %arg3[%c0_3, %c0_4] : memref<32x8xf32, #tpu.memory_space<vmem>>, vector<32x8xf32>
    %c0_5 = arith.constant 0 : index
    %c0_6 = arith.constant 0 : index
    %3 = vector.load %arg4[%c0_5, %c0_6] : memref<16x32xf32, #tpu.memory_space<vmem>>, vector<16x32xf32>
    %cst = arith.constant dense<0.000000e+00> : vector<32x32xf32>
    %4 = tpu.matmul %0, %3, %cst {dimension_numbers = #tpu.dot_dimension_numbers<[1], [0], [0], [1], [0, 0, 1, 1], [], []>} : vector<32x16xf32>, vector<16x32xf32>, vector<32x32xf32> -> vector<32x32xf32>
    %c0_7 = arith.constant 0 : index
    %c0_8 = arith.constant 0 : index
    %5 = vector.load %arg5[%c0_7, %c0_8] : memref<1x32xf32, #tpu.memory_space<vmem>>, vector<1x32xf32>
    %6 = vector.broadcast %5 : vector<1x32xf32> to vector<32x32xf32>
    %7 = arith.addf %4, %6 : vector<32x32xf32>
    %c0_9 = arith.constant 0 : index
    %c0_10 = arith.constant 0 : index
    %8 = vector.load %arg6[%c0_9, %c0_10] : memref<16x32xf32, #tpu.memory_space<vmem>>, vector<16x32xf32>
    %cst_11 = arith.constant dense<0.000000e+00> : vector<32x32xf32>
    %9 = tpu.matmul %1, %8, %cst_11 {dimension_numbers = #tpu.dot_dimension_numbers<[1], [0], [0], [1], [0, 0, 1, 1], [], []>} : vector<32x16xf32>, vector<16x32xf32>, vector<32x32xf32> -> vector<32x32xf32>
    %c0_12 = arith.constant 0 : index
    %c0_13 = arith.constant 0 : index
    %10 = vector.load %arg7[%c0_12, %c0_13] : memref<1x32xf32, #tpu.memory_space<vmem>>, vector<1x32xf32>
    %11 = vector.broadcast %10 : vector<1x32xf32> to vector<32x32xf32>
    %12 = arith.addf %9, %11 : vector<32x32xf32>
    %c2_i32 = arith.constant 2 : i32
    %13 = tpu.dynamic_rotate %12 by %c2_i32 dim 0 : vector<32x32xf32>, i32 -> vector<32x32xf32>
    %c2_i32_14 = arith.constant 2 : i32
    %14 = tpu.dynamic_rotate %2 by %c2_i32_14 dim 0 : vector<32x8xf32>, i32 -> vector<32x8xf32>
    %15 = arith.mulf %7, %13 : vector<32x32xf32>
    %c1_i32 = arith.constant 1 : i32
    %16 = tpu.dynamic_rotate %12 by %c1_i32 dim 0 : vector<32x32xf32>, i32 -> vector<32x32xf32>
    %c1_i32_15 = arith.constant 1 : i32
    %17 = tpu.dynamic_rotate %2 by %c1_i32_15 dim 0 : vector<32x8xf32>, i32 -> vector<32x8xf32>
    %18 = arith.mulf %7, %16 : vector<32x32xf32>
    %19 = arith.mulf %7, %12 : vector<32x32xf32>
    %c31_i32 = arith.constant 31 : i32
    %20 = tpu.dynamic_rotate %12 by %c31_i32 dim 0 : vector<32x32xf32>, i32 -> vector<32x32xf32>
    %c31_i32_16 = arith.constant 31 : i32
    %21 = tpu.dynamic_rotate %2 by %c31_i32_16 dim 0 : vector<32x8xf32>, i32 -> vector<32x8xf32>
    %22 = arith.mulf %7, %20 : vector<32x32xf32>
    %c30_i32 = arith.constant 30 : i32
    %23 = tpu.dynamic_rotate %12 by %c30_i32 dim 0 : vector<32x32xf32>, i32 -> vector<32x32xf32>
    %c30_i32_17 = arith.constant 30 : i32
    %24 = tpu.dynamic_rotate %2 by %c30_i32_17 dim 0 : vector<32x8xf32>, i32 -> vector<32x8xf32>
    %25 = arith.mulf %7, %23 : vector<32x32xf32>
    %26 = tpu.concatenate %15, %18, %19, %22, %25 in 1 : vector<32x32xf32>, vector<32x32xf32>, vector<32x32xf32>, vector<32x32xf32>, vector<32x32xf32> -> vector<32x160xf32>
    %27 = tpu.concatenate %14, %17, %2, %21, %24 in 1 : vector<32x8xf32>, vector<32x8xf32>, vector<32x8xf32>, vector<32x8xf32>, vector<32x8xf32> -> vector<32x40xf32>
    %c0_18 = arith.constant 0 : index
    %c0_19 = arith.constant 0 : index
    %28 = vector.load %arg12[%c0_18, %c0_19] : memref<160x20xf32, #tpu.memory_space<vmem>>, vector<160x20xf32>
    %cst_20 = arith.constant dense<0.000000e+00> : vector<32x20xf32>
    %29 = tpu.matmul %26, %28, %cst_20 {dimension_numbers = #tpu.dot_dimension_numbers<[1], [0], [0], [1], [0, 0, 1, 1], [], []>} : vector<32x160xf32>, vector<160x20xf32>, vector<32x20xf32> -> vector<32x20xf32>
    %c0_21 = arith.constant 0 : index
    %c0_22 = arith.constant 0 : index
    %30 = vector.load %arg8[%c0_21, %c0_22] : memref<1x20xf32, #tpu.memory_space<vmem>>, vector<1x20xf32>
    %31 = vector.broadcast %30 : vector<1x20xf32> to vector<32x20xf32>
    %32 = arith.mulf %29, %31 : vector<32x20xf32>
    %c0_23 = arith.constant 0 : index
    %c0_24 = arith.constant 0 : index
    %33 = vector.load %arg9[%c0_23, %c0_24] : memref<1x20xf32, #tpu.memory_space<vmem>>, vector<1x20xf32>
    %34 = vector.broadcast %33 : vector<1x20xf32> to vector<32x20xf32>
    %35 = arith.addf %32, %34 : vector<32x20xf32>
    %36 = math.tanh %35 : vector<32x20xf32>
    %c0_25 = arith.constant 0 : index
    %c0_26 = arith.constant 0 : index
    %37 = vector.load %arg10[%c0_25, %c0_26] : memref<32x20xf32, #tpu.memory_space<vmem>>, vector<32x20xf32>
    %38 = arith.mulf %36, %37 : vector<32x20xf32>
    %c0_27 = arith.constant 0 : index
    %c0_28 = arith.constant 0 : index
    %39 = vector.load %arg11[%c0_27, %c0_28] : memref<32x20xf32, #tpu.memory_space<vmem>>, vector<32x20xf32>
    %40 = arith.addf %38, %39 : vector<32x20xf32>
    %c0_29 = arith.constant 0 : index
    %c0_30 = arith.constant 0 : index
    %41 = vector.load %arg13[%c0_29, %c0_30] : memref<20x20xf32, #tpu.memory_space<vmem>>, vector<20x20xf32>
    %cst_31 = arith.constant dense<0.000000e+00> : vector<32x20xf32>
    %42 = tpu.matmul %40, %41, %cst_31 {dimension_numbers = #tpu.dot_dimension_numbers<[1], [0], [0], [1], [0, 0, 1, 1], [], []>} : vector<32x20xf32>, vector<20x20xf32>, vector<32x20xf32> -> vector<32x20xf32>
    %c0_32 = arith.constant 0 : index
    %c0_33 = arith.constant 0 : index
    %43 = vector.load %arg16[%c0_32, %c0_33] : memref<40x108xf32, #tpu.memory_space<vmem>>, vector<40x108xf32>
    %c0_34 = arith.constant 0 : index
    %c0_35 = arith.constant 0 : index
    %44 = vector.load %arg14[%c0_34, %c0_35] : memref<20x40xf32, #tpu.memory_space<vmem>>, vector<20x40xf32>
    %c0_36 = arith.constant 0 : index
    %c0_37 = arith.constant 0 : index
    %45 = vector.load %arg15[%c0_36, %c0_37] : memref<20x40xf32, #tpu.memory_space<vmem>>, vector<20x40xf32>
    %46 = arith.subf %44, %45 : vector<20x40xf32>
    %cst_38 = arith.constant dense<0.000000e+00> : vector<32x40xf32>
    %47 = tpu.matmul %40, %46, %cst_38 {dimension_numbers = #tpu.dot_dimension_numbers<[1], [0], [0], [1], [0, 0, 1, 1], [], []>} : vector<32x20xf32>, vector<20x40xf32>, vector<32x40xf32> -> vector<32x40xf32>
    %48 = arith.mulf %47, %27 : vector<32x40xf32>
    %cst_39 = arith.constant dense<0.000000e+00> : vector<32x108xf32>
    %49 = tpu.matmul %48, %43, %cst_39 {dimension_numbers = #tpu.dot_dimension_numbers<[1], [0], [0], [1], [0, 0, 1, 1], [], []>} : vector<32x40xf32>, vector<40x108xf32>, vector<32x108xf32> -> vector<32x108xf32>
    %50 = tpu.concatenate %42, %49 in 1 : vector<32x20xf32>, vector<32x108xf32> -> vector<32x128xf32>
    %c0_40 = arith.constant 0 : index
    %c0_41 = arith.constant 0 : index
    %51 = vector.load %arg17[%c0_40, %c0_41] : memref<32x128xf32, #tpu.memory_space<vmem>>, vector<32x128xf32>
    tpu.vector_store %arg17[%c0_40, %c0_41], %50 {strides = array<i32>} : memref<32x128xf32, #tpu.memory_space<vmem>>, vector<32x128xf32>,
    return
  }
  func.func @transform_0(%arg0: i32) -> (i32, i32) {
    %c0_i32 = arith.constant 0 : i32
    %c0_i32_0 = arith.constant 0 : i32
    return %arg0, %c0_i32 : i32, i32
  }
  func.func @transform_1(%arg0: i32) -> (i32, i32) {
    %c0_i32 = arith.constant 0 : i32
    %c0_i32_0 = arith.constant 0 : i32
    return %arg0, %c0_i32 : i32, i32
  }
  func.func @transform_2(%arg0: i32) -> (i32, i32) {
    %c0_i32 = arith.constant 0 : i32
    %c0_i32_0 = arith.constant 0 : i32
    return %arg0, %c0_i32 : i32, i32
  }
  func.func @transform_3(%arg0: i32) -> (i32, i32) {
    %c0_i32 = arith.constant 0 : i32
    %c0_i32_0 = arith.constant 0 : i32
    %c0_i32_1 = arith.constant 0 : i32
    return %c0_i32, %c0_i32_0 : i32, i32
  }
  func.func @transform_4(%arg0: i32) -> (i32, i32) {
    %c0_i32 = arith.constant 0 : i32
    %c0_i32_0 = arith.constant 0 : i32
    %c0_i32_1 = arith.constant 0 : i32
    return %c0_i32, %c0_i32_0 : i32, i32
  }
  func.func @transform_5(%arg0: i32) -> (i32, i32) {
    %c0_i32 = arith.constant 0 : i32
    %c0_i32_0 = arith.constant 0 : i32
    %c0_i32_1 = arith.constant 0 : i32
    return %c0_i32, %c0_i32_0 : i32, i32
  }
  func.func @transform_6(%arg0: i32) -> (i32, i32) {
    %c0_i32 = arith.constant 0 : i32
    %c0_i32_0 = arith.constant 0 : i32
    %c0_i32_1 = arith.constant 0 : i32
    return %c0_i32, %c0_i32_0 : i32, i32
  }
  func.func @transform_7(%arg0: i32) -> (i32, i32) {
    %c0_i32 = arith.constant 0 : i32
    %c0_i32_0 = arith.constant 0 : i32
    %c0_i32_1 = arith.constant 0 : i32
    return %c0_i32, %c0_i32_0 : i32, i32
  }
  func.func @transform_8(%arg0: i32) -> (i32, i32) {
    %c0_i32 = arith.constant 0 : i32
    %c0_i32_0 = arith.constant 0 : i32
    %c0_i32_1 = arith.constant 0 : i32
    return %c0_i32, %c0_i32_0 : i32, i32
  }
  func.func @transform_9(%arg0: i32) -> (i32, i32) {
    %c0_i32 = arith.constant 0 : i32
    %c0_i32_0 = arith.constant 0 : i32
    %c0_i32_1 = arith.constant 0 : i32
    return %c0_i32, %c0_i32_0 : i32, i32
  }
  func.func @transform_10(%arg0: i32) -> (i32, i32) {
    %c0_i32 = arith.constant 0 : i32
    %c0_i32_0 = arith.constant 0 : i32
    %c0_i32_1 = arith.constant 0 : i32
    return %c0_i32, %c0_i32_0 : i32, i32
  }
  func.func @transform_11(%arg0: i32) -> (i32, i32) {
    %c0_i32 = arith.constant 0 : i32
    %c0_i32_0 = arith.constant 0 : i32
    %c0_i32_1 = arith.constant 0 : i32
    return %c0_i32, %c0_i32_0 : i32, i32
  }
  func.func @transform_12(%arg0: i32) -> (i32, i32) {
    %c0_i32 = arith.constant 0 : i32
    %c0_i32_0 = arith.constant 0 : i32
    %c0_i32_1 = arith.constant 0 : i32
    return %c0_i32, %c0_i32_0 : i32, i32
  }
  func.func @transform_13(%arg0: i32) -> (i32, i32) {
    %c0_i32 = arith.constant 0 : i32
    %c0_i32_0 = arith.constant 0 : i32
    %c0_i32_1 = arith.constant 0 : i32
    return %c0_i32, %c0_i32_0 : i32, i32
  }
  func.func @transform_14(%arg0: i32) -> (i32, i32) {
    %c0_i32 = arith.constant 0 : i32
    %c0_i32_0 = arith.constant 0 : i32
    %c0_i32_1 = arith.constant 0 : i32
    return %c0_i32, %c0_i32_0 : i32, i32
  }
  func.func @transform_15(%arg0: i32) -> (i32, i32) {
    %c0_i32 = arith.constant 0 : i32
    %c0_i32_0 = arith.constant 0 : i32
    %c0_i32_1 = arith.constant 0 : i32
    return %c0_i32, %c0_i32_0 : i32, i32
  }
  func.func @transform_16(%arg0: i32) -> (i32, i32) {
    %c0_i32 = arith.constant 0 : i32
    %c0_i32_0 = arith.constant 0 : i32
    return %arg0, %c0_i32 : i32, i32
  }
}

</mosaic_0001>

<llo_original>
// kernel: tile.23
$region0: #{tile.23}
  #allocation0 [shape = 's32[1]{0}', space=sflag, size = 0x4, scoped, tag = 'scoped memory for tile.23']
  %s0 = inlined_call_operand.vmem [shape: f32[8], index: 0, kind: input, shape index: {}]
  %s1 = inlined_call_operand.vmem [shape: f32[2,8], index: 1, kind: output, shape index: {}]
  // Predicated region
  $region2: #{tile.23} parent=0 // pred_check
    _
  $region3: #{tile.23} parent=0 // pred_check_branch
    %3 = sbr.rel (0) target = $region5
  $region4: #{tile.23} parent=0 // pred_region
    _
  $region5: #{tile.23} parent=0 // pred_fallthru
    _
  %v4 = vld [vmem:[%s0] ss:$0 sm:$0xff]
  %5 = vst [vmem:[%s1] sm:$0x3] %v4

// kernel: tile.24
$region0: #{tile.24}
  %s0 = inlined_call_operand.vmem [shape: f32[2,8], index: 0, kind: input, shape index: {}]
  %s1 = inlined_call_operand.vmem [shape: f32[16], index: 1, kind: output, shape index: {}]
  $region1: #{tile.24} parent=0
    #allocation0 [shape = 'u8[4096]{0}', space=vmem, size = 0x1000, scoped, tag = 'scoped mem for output reshape']
    #allocation1 [shape = 'u8[4096]{0}', space=vmem, size = 0x1000, scoped, tag = 'scoped mem for input reshape']
    %s3 = sshll.u32 1, 2
    %s4 = ssub.s32 %s3, 1
    %v5 = vld [vmem:[%s0] sm:%s4]
    %6 = vst [vmem:[#allocation1] sm:%s4] %v5
    %v7 = vld [vmem:[#allocation1] sm:$0x1]
    %vm8 = vcmask 64512
    %9 = vst.msk [vmem:[#allocation0] sm:$0x1] %vm8, %v7
    %s10 = scalar_lea.vmem [#allocation1], 1
    %v11 = vld [vmem:[%s10] sm:$0x1]
    %12 = vrot.lane.b32.xlu0 %v11, 8
    %v13 = vpop.permute.xlu0 %12
    %vm14 = vcmask 130112
    %15 = vst.msk [vmem:[#allocation0] sm:$0x1] %vm14, %v13
    %s17 = sshll.u32 1, 1
    %s18 = ssub.s32 %s17, 1
    %v20 = vld [vmem:[#allocation0] sm:%s18]
    %s21 = sshll.u32 1, 1
    %s22 = ssub.s32 %s21, 1
    %23 = vst [vmem:[%s1] sm:%s22] %v20

// kernel: operation_on_attention_layers.1
$region0: #{operation_on_attention_layers.1}
  #allocation0 [shape = 'u32[]', space=smem, size = 0x4, offset = 0x4, fixed_abs, tag = 'smem constant byte address 0x4 - core index']
  #allocation1 [shape = 'u32[144,128]{1,0:T(1,128)}', space=vmem, size = 0x12000, scoped, tag = 'internal scratch']
  %s0 = inlined_call_operand.vmem [shape: f32[32,16], index: 0, kind: input, shape index: {}]
  %s1 = inlined_call_operand.vmem [shape: f32[32,16], index: 1, kind: input, shape index: {}]
  %s2 = inlined_call_operand.vmem [shape: f32[32,8], index: 2, kind: input, shape index: {}]
  %s3 = inlined_call_operand.vmem [shape: f32[16,32], index: 3, kind: input, shape index: {}]
  %s4 = inlined_call_operand.vmem [shape: f32[1,32], index: 4, kind: input, shape index: {}]
  %s5 = inlined_call_operand.vmem [shape: f32[16,32], index: 5, kind: input, shape index: {}]
  %s6 = inlined_call_operand.vmem [shape: f32[1,32], index: 6, kind: input, shape index: {}]
  %s7 = inlined_call_operand.vmem [shape: f32[1,20], index: 7, kind: input, shape index: {}]
  %s8 = inlined_call_operand.vmem [shape: f32[1,20], index: 8, kind: input, shape index: {}]
  %s9 = inlined_call_operand.vmem [shape: f32[32,20], index: 9, kind: input, shape index: {}]
  %s10 = inlined_call_operand.vmem [shape: f32[32,20], index: 10, kind: input, shape index: {}]
  %s11 = inlined_call_operand.vmem [shape: f32[160,20], index: 11, kind: input, shape index: {}]
  %s12 = inlined_call_operand.vmem [shape: f32[20,20], index: 12, kind: input, shape index: {}]
  %s13 = inlined_call_operand.vmem [shape: f32[20,40], index: 13, kind: input, shape index: {}]
  %s14 = inlined_call_operand.vmem [shape: f32[20,40], index: 14, kind: input, shape index: {}]
  %s15 = inlined_call_operand.vmem [shape: f32[40,108], index: 15, kind: input, shape index: {}]
  %s16 = inlined_call_operand.vmem [shape: f32[32,128], index: 16, kind: output, shape index: {}]
  %s17 = sld [smem:[#allocation0]]
  $region74: #{operation_on_attention_layers.1} parent=0
    _
  %s19 = ssub.s32 1, %s17
  %s20 = scalar_select 0, %s19, %s17
  // Predicated region
  $region2: #{operation_on_attention_layers.1} parent=0 // pred_check
    _
  $region3: #{operation_on_attention_layers.1} parent=0 // pred_check_branch
    %22 = sbr.rel (0) target = $region5
  $region4: #{operation_on_attention_layers.1} parent=0 // pred_region
    _
  $region5: #{operation_on_attention_layers.1} parent=0 // pred_fallthru
    _
  // Predicated region
  $region6: #{operation_on_attention_layers.1} parent=0 // pred_check
    _
  $region7: #{operation_on_attention_layers.1} parent=0 // pred_check_branch
    %24 = sbr.rel (0) target = $region9
  $region8: #{operation_on_attention_layers.1} parent=0 // pred_region
    _
  $region9: #{operation_on_attention_layers.1} parent=0 // pred_fallthru
    _
  // Predicated region
  $region10: #{operation_on_attention_layers.1} parent=0 // pred_check
    _
  $region11: #{operation_on_attention_layers.1} parent=0 // pred_check_branch
    %26 = sbr.rel (0) target = $region13
  $region12: #{operation_on_attention_layers.1} parent=0 // pred_region
    _
  $region13: #{operation_on_attention_layers.1} parent=0 // pred_fallthru
    _
  // Predicated region
  $region14: #{operation_on_attention_layers.1} parent=0 // pred_check
    _
  $region15: #{operation_on_attention_layers.1} parent=0 // pred_check_branch
    %28 = sbr.rel (0) target = $region17
  $region16: #{operation_on_attention_layers.1} parent=0 // pred_region
    _
  $region17: #{operation_on_attention_layers.1} parent=0 // pred_fallthru
    _
  // Predicated region
  $region18: #{operation_on_attention_layers.1} parent=0 // pred_check
    _
  $region19: #{operation_on_attention_layers.1} parent=0 // pred_check_branch
    %30 = sbr.rel (0) target = $region21
  $region20: #{operation_on_attention_layers.1} parent=0 // pred_region
    _
  $region21: #{operation_on_attention_layers.1} parent=0 // pred_fallthru
    _
  // Predicated region
  $region22: #{operation_on_attention_layers.1} parent=0 // pred_check
    _
  $region23: #{operation_on_attention_layers.1} parent=0 // pred_check_branch
    %32 = sbr.rel (0) target = $region25
  $region24: #{operation_on_attention_layers.1} parent=0 // pred_region
    _
  $region25: #{operation_on_attention_layers.1} parent=0 // pred_fallthru
    _
  // Predicated region
  $region26: #{operation_on_attention_layers.1} parent=0 // pred_check
    _
  $region27: #{operation_on_attention_layers.1} parent=0 // pred_check_branch
    %34 = sbr.rel (0) target = $region29
  $region28: #{operation_on_attention_layers.1} parent=0 // pred_region
    _
  $region29: #{operation_on_attention_layers.1} parent=0 // pred_fallthru
    _
  // Predicated region
  $region30: #{operation_on_attention_layers.1} parent=0 // pred_check
    _
  $region31: #{operation_on_attention_layers.1} parent=0 // pred_check_branch
    %36 = sbr.rel (0) target = $region33
  $region32: #{operation_on_attention_layers.1} parent=0 // pred_region
    _
  $region33: #{operation_on_attention_layers.1} parent=0 // pred_fallthru
    _
  // Predicated region
  $region34: #{operation_on_attention_layers.1} parent=0 // pred_check
    _
  $region35: #{operation_on_attention_layers.1} parent=0 // pred_check_branch
    %38 = sbr.rel (0) target = $region37
  $region36: #{operation_on_attention_layers.1} parent=0 // pred_region
    _
  $region37: #{operation_on_attention_layers.1} parent=0 // pred_fallthru
    _
  // Predicated region
  $region38: #{operation_on_attention_layers.1} parent=0 // pred_check
    _
  $region39: #{operation_on_attention_layers.1} parent=0 // pred_check_branch
    %40 = sbr.rel (0) target = $region41
  $region40: #{operation_on_attention_layers.1} parent=0 // pred_region
    _
  $region41: #{operation_on_attention_layers.1} parent=0 // pred_fallthru
    _
  // Predicated region
  $region42: #{operation_on_attention_layers.1} parent=0 // pred_check
    _
  $region43: #{operation_on_attention_layers.1} parent=0 // pred_check_branch
    %42 = sbr.rel (0) target = $region45
  $region44: #{operation_on_attention_layers.1} parent=0 // pred_region
    _
  $region45: #{operation_on_attention_layers.1} parent=0 // pred_fallthru
    _
  // Predicated region
  $region46: #{operation_on_attention_layers.1} parent=0 // pred_check
    _
  $region47: #{operation_on_attention_layers.1} parent=0 // pred_check_branch
    %44 = sbr.rel (0) target = $region49
  $region48: #{operation_on_attention_layers.1} parent=0 // pred_region
    _
  $region49: #{operation_on_attention_layers.1} parent=0 // pred_fallthru
    _
  // Predicated region
  $region50: #{operation_on_attention_layers.1} parent=0 // pred_check
    _
  $region51: #{operation_on_attention_layers.1} parent=0 // pred_check_branch
    %46 = sbr.rel (0) target = $region53
  $region52: #{operation_on_attention_layers.1} parent=0 // pred_region
    _
  $region53: #{operation_on_attention_layers.1} parent=0 // pred_fallthru
    _
  // Predicated region
  $region54: #{operation_on_attention_layers.1} parent=0 // pred_check
    _
  $region55: #{operation_on_attention_layers.1} parent=0 // pred_check_branch
    %48 = sbr.rel (0) target = $region57
  $region56: #{operation_on_attention_layers.1} parent=0 // pred_region
    _
  $region57: #{operation_on_attention_layers.1} parent=0 // pred_fallthru
    _
  // Predicated region
  $region58: #{operation_on_attention_layers.1} parent=0 // pred_check
    _
  $region59: #{operation_on_attention_layers.1} parent=0 // pred_check_branch
    %50 = sbr.rel (0) target = $region61
  $region60: #{operation_on_attention_layers.1} parent=0 // pred_region
    _
  $region61: #{operation_on_attention_layers.1} parent=0 // pred_fallthru
    _
  // Predicated region
  $region62: #{operation_on_attention_layers.1} parent=0 // pred_check
    _
  $region63: #{operation_on_attention_layers.1} parent=0 // pred_check_branch
    %52 = sbr.rel (0) target = $region65
  $region64: #{operation_on_attention_layers.1} parent=0 // pred_region
    _
  $region65: #{operation_on_attention_layers.1} parent=0 // pred_fallthru
    _
  %v53 = vld [vmem:[%s0] sm:$0xff]
  %v54 = vld [vmem:[%s0 + $0x8] sm:$0xff]
  %v55 = vld [vmem:[%s0 + $0x10] sm:$0xff]
  %v56 = vld [vmem:[%s0 + $0x18] sm:$0xff]
  %v57 = vld [vmem:[%s1] sm:$0xff]
  %v58 = vld [vmem:[%s1 + $0x8] sm:$0xff]
  %v59 = vld [vmem:[%s1 + $0x10] sm:$0xff]
  %v60 = vld [vmem:[%s1 + $0x18] sm:$0xff]
  %v61 = vld [vmem:[%s2] sm:$0xff]
  %v62 = vld [vmem:[%s2 + $0x8] sm:$0xff]
  %v63 = vld [vmem:[%s2 + $0x10] sm:$0xff]
  %v64 = vld [vmem:[%s2 + $0x18] sm:$0xff]
  %v65 = vld [vmem:[%s3] sm:$0xff]
  %v66 = vld [vmem:[%s3 + $0x8] sm:$0xff]
  %v67 = vld [vmem:[%s4] sm:$0x1]
  %v69 = vlaneseq
  %v70 = vshrl.u32 %v69, 7
  %v71 = vsub.s32 0, %v70
  %v72 = vrot.slane %v67, %v71
  %vm74 = vcmask 130048
  %v76 = vsel %vm74, %v53, 0
  %v79 = vsel %vm74, %v54, 0
  %v82 = vsel %vm74, %v55, 0
  %v85 = vsel %vm74, %v56, 0
  %87 = vmatprep.subr.mxu0 0.0
  %88 = vmatpush1.msra.mxu0 0.0
  %89 = vmatprep.subr.mxu0 0.0
  %90 = vmatpush1.msra.mxu0 0.0
  %91 = vmatprep.subr.mxu0 0.0
  %92 = vmatpush1.msra.mxu0 0.0
  %93 = vmatprep.subr.mxu0 0.0
  %94 = vmatpush1.msra.mxu0 0.0
  %95 = vmatprep.subr.mxu0 0.0
  %96 = vmatpush1.msra.mxu0 0.0
  %97 = vmatprep.subr.mxu0 0.0
  %98 = vmatpush1.msra.mxu0 0.0
  %99 = vmatprep.subr.mxu0 0.0
  %100 = vmatpush1.msra.mxu0 0.0
  %101 = vmatprep.subr.mxu0 0.0
  %102 = vmatpush1.msra.mxu0 0.0
  %103 = vmatprep.subr.mxu0 0.0
  %104 = vmatpush1.msra.mxu0 0.0
  %105 = vmatprep.subr.mxu0 0.0
  %106 = vmatpush1.msra.mxu0 0.0
  %107 = vmatprep.subr.mxu0 0.0
  %108 = vmatpush1.msra.mxu0 0.0
  %109 = vmatprep.subr.mxu0 0.0
  %110 = vmatpush1.msra.mxu0 0.0
  %111 = vmatprep.subr.mxu0 0.0
  %112 = vmatpush1.msra.mxu0 0.0
  %113 = vmatprep.subr.mxu0 0.0
  %114 = vmatpush1.msra.mxu0 0.0
  %115 = vmatprep.subr.mxu0 0.0
  %116 = vmatpush1.msra.mxu0 %v66
  %117 = vmatprep.subr.mxu0 0.0
  %118 = vmatpush1.msra.mxu0 %v65
  %119 = vmatprep.subr.mxu0 0.0
  %120 = vmatpush2.msra.mxu0 0.0
  %121 = vmatprep.subr.mxu0 0.0
  %122 = vmatpush2.msra.mxu0 0.0
  %123 = vmatprep.subr.mxu0 0.0
  %124 = vmatpush2.msra.mxu0 0.0
  %125 = vmatprep.subr.mxu0 0.0
  %126 = vmatpush2.msra.mxu0 0.0
  %127 = vmatprep.subr.mxu0 0.0
  %128 = vmatpush2.msra.mxu0 0.0
  %129 = vmatprep.subr.mxu0 0.0
  %130 = vmatpush2.msra.mxu0 0.0
  %131 = vmatprep.subr.mxu0 0.0
  %132 = vmatpush2.msra.mxu0 0.0
  %133 = vmatprep.subr.mxu0 0.0
  %134 = vmatpush2.msra.mxu0 0.0
  %135 = vmatprep.subr.mxu0 0.0
  %136 = vmatpush2.msra.mxu0 0.0
  %137 = vmatprep.subr.mxu0 0.0
  %138 = vmatpush2.msra.mxu0 0.0
  %139 = vmatprep.subr.mxu0 0.0
  %140 = vmatpush2.msra.mxu0 0.0
  %141 = vmatprep.subr.mxu0 0.0
  %142 = vmatpush2.msra.mxu0 0.0
  %143 = vmatprep.subr.mxu0 0.0
  %144 = vmatpush2.msra.mxu0 0.0
  %145 = vmatprep.subr.mxu0 0.0
  %146 = vmatpush2.msra.mxu0 0.0
  %147 = vmatprep.subr.mxu0 0.0
  %148 = vmatpush2.msra.mxu0 0.0
  %149 = vmatprep.subr.mxu0 0.0
  %150 = vmatpush2.msra.mxu0 0.0
  %151 = vmatprep.mubr.f32.mxu0 0.0
  %152 = vmatmul.mubr.f32.gmra.mxu0 %v76
  %v153 = vpop.f32.mrf.mxu0
  %v154 = vadd.f32 %v72, %v153
  %v155 = vpop.f32.mrf.mxu0
  %156 = vmatprep.mubr.f32.mxu0 0.0
  %157 = vmatmul.mubr.f32.gmra.mxu0 %v79
  %v158 = vpop.f32.mrf.mxu0
  %v159 = vadd.f32 %v72, %v158
  %v160 = vpop.f32.mrf.mxu0
  %161 = vmatprep.mubr.f32.mxu0 0.0
  %162 = vmatmul.mubr.f32.gmra.mxu0 %v82
  %v163 = vpop.f32.mrf.mxu0
  %v164 = vadd.f32 %v72, %v163
  %v165 = vpop.f32.mrf.mxu0
  %166 = vmatprep.mubr.f32.mxu0 0.0
  %167 = vmatmul.mubr.f32.gmra.mxu0 %v85
  %v168 = vpop.f32.mrf.mxu0
  %v169 = vadd.f32 %v72, %v168
  %v170 = vpop.f32.mrf.mxu0
  %171 = vdwg.mxu0
  %v172 = vld [vmem:[%s5] sm:$0xff]
  %v173 = vld [vmem:[%s5 + $0x8] sm:$0xff]
  %v174 = vld [vmem:[%s6] sm:$0x1]
  %v176 = vlaneseq
  %v177 = vshrl.u32 %v176, 7
  %v178 = vsub.s32 0, %v177
  %v179 = vrot.slane %v174, %v178
  %v182 = vsel %vm74, %v57, 0
  %v185 = vsel %vm74, %v58, 0
  %v188 = vsel %vm74, %v59, 0
  %v191 = vsel %vm74, %v60, 0
  %193 = vmatprep.subr.mxu0 0.0
  %194 = vmatpush1.msra.mxu0 0.0
  %195 = vmatprep.subr.mxu0 0.0
  %196 = vmatpush1.msra.mxu0 0.0
  %197 = vmatprep.subr.mxu0 0.0
  %198 = vmatpush1.msra.mxu0 0.0
  %199 = vmatprep.subr.mxu0 0.0
  %200 = vmatpush1.msra.mxu0 0.0
  %201 = vmatprep.subr.mxu0 0.0
  %202 = vmatpush1.msra.mxu0 0.0
  %203 = vmatprep.subr.mxu0 0.0
  %204 = vmatpush1.msra.mxu0 0.0
  %205 = vmatprep.subr.mxu0 0.0
  %206 = vmatpush1.msra.mxu0 0.0
  %207 = vmatprep.subr.mxu0 0.0
  %208 = vmatpush1.msra.mxu0 0.0
  %209 = vmatprep.subr.mxu0 0.0
  %210 = vmatpush1.msra.mxu0 0.0
  %211 = vmatprep.subr.mxu0 0.0
  %212 = vmatpush1.msra.mxu0 0.0
  %213 = vmatprep.subr.mxu0 0.0
  %214 = vmatpush1.msra.mxu0 0.0
  %215 = vmatprep.subr.mxu0 0.0
  %216 = vmatpush1.msra.mxu0 0.0
  %217 = vmatprep.subr.mxu0 0.0
  %218 = vmatpush1.msra.mxu0 0.0
  %219 = vmatprep.subr.mxu0 0.0
  %220 = vmatpush1.msra.mxu0 0.0
  %221 = vmatprep.subr.mxu0 0.0
  %222 = vmatpush1.msra.mxu0 %v173
  %223 = vmatprep.subr.mxu0 0.0
  %224 = vmatpush1.msra.mxu0 %v172
  %225 = vmatprep.subr.mxu0 0.0
  %226 = vmatpush2.msra.mxu0 0.0
  %227 = vmatprep.subr.mxu0 0.0
  %228 = vmatpush2.msra.mxu0 0.0
  %229 = vmatprep.subr.mxu0 0.0
  %230 = vmatpush2.msra.mxu0 0.0
  %231 = vmatprep.subr.mxu0 0.0
  %232 = vmatpush2.msra.mxu0 0.0
  %233 = vmatprep.subr.mxu0 0.0
  %234 = vmatpush2.msra.mxu0 0.0
  %235 = vmatprep.subr.mxu0 0.0
  %236 = vmatpush2.msra.mxu0 0.0
  %237 = vmatprep.subr.mxu0 0.0
  %238 = vmatpush2.msra.mxu0 0.0
  %239 = vmatprep.subr.mxu0 0.0
  %240 = vmatpush2.msra.mxu0 0.0
  %241 = vmatprep.subr.mxu0 0.0
  %242 = vmatpush2.msra.mxu0 0.0
  %243 = vmatprep.subr.mxu0 0.0
  %244 = vmatpush2.msra.mxu0 0.0
  %245 = vmatprep.subr.mxu0 0.0
  %246 = vmatpush2.msra.mxu0 0.0
  %247 = vmatprep.subr.mxu0 0.0
  %248 = vmatpush2.msra.mxu0 0.0
  %249 = vmatprep.subr.mxu0 0.0
  %250 = vmatpush2.msra.mxu0 0.0
  %251 = vmatprep.subr.mxu0 0.0
  %252 = vmatpush2.msra.mxu0 0.0
  %253 = vmatprep.subr.mxu0 0.0
  %254 = vmatpush2.msra.mxu0 0.0
  %255 = vmatprep.subr.mxu0 0.0
  %256 = vmatpush2.msra.mxu0 0.0
  %257 = vmatprep.mubr.f32.mxu0 0.0
  %258 = vmatmul.mubr.f32.gmra.mxu0 %v182
  %v259 = vpop.f32.mrf.mxu0
  %v260 = vadd.f32 %v179, %v259
  %v261 = vpop.f32.mrf.mxu0
  %262 = vmatprep.mubr.f32.mxu0 0.0
  %263 = vmatmul.mubr.f32.gmra.mxu0 %v185
  %v264 = vpop.f32.mrf.mxu0
  %v265 = vadd.f32 %v179, %v264
  %v266 = vpop.f32.mrf.mxu0
  %267 = vmatprep.mubr.f32.mxu0 0.0
  %268 = vmatmul.mubr.f32.gmra.mxu0 %v188
  %v269 = vpop.f32.mrf.mxu0
  %v270 = vadd.f32 %v179, %v269
  %v271 = vpop.f32.mrf.mxu0
  %272 = vmatprep.mubr.f32.mxu0 0.0
  %273 = vmatmul.mubr.f32.gmra.mxu0 %v191
  %v274 = vpop.f32.mrf.mxu0
  %v275 = vadd.f32 %v179, %v274
  %v276 = vpop.f32.mrf.mxu0
  %277 = vdwg.mxu0
  %v278 = vrot.slane %v260, 6
  %v279 = vrot.slane %v265, 6
  %v280 = vrot.slane %v270, 6
  %v281 = vrot.slane %v275, 6
  %v282 = vlaneseq
  %v283 = vshrl.u32 %v282, 7
  %vm284 = vcmp.lt.s32.totalorder %v283, 2
  %v285 = vsel %vm284, %v280, %v281
  %v286 = vsel %vm284, %v279, %v280
  %v287 = vsel %vm284, %v278, %v279
  %v288 = vsel %vm284, %v281, %v278
  %v289 = vrot.slane %v61, 6
  %v290 = vrot.slane %v62, 6
  %v291 = vrot.slane %v63, 6
  %v292 = vrot.slane %v64, 6
  %v293 = vsel %vm284, %v291, %v292
  %v294 = vsel %vm284, %v290, %v291
  %v295 = vsel %vm284, %v289, %v290
  %v296 = vsel %vm284, %v292, %v289
  %v297 = vmul.f32 %v154, %v288
  %v298 = vmul.f32 %v159, %v287
  %v299 = vmul.f32 %v164, %v286
  %v300 = vmul.f32 %v169, %v285
  %v301 = vrot.slane %v260, 7
  %v302 = vrot.slane %v265, 7
  %v303 = vrot.slane %v270, 7
  %v304 = vrot.slane %v275, 7
  %vm305 = vcmp.lt.s32.totalorder %v283, 1
  %v306 = vsel %vm305, %v303, %v304
  %v307 = vsel %vm305, %v302, %v303
  %v308 = vsel %vm305, %v301, %v302
  %v309 = vsel %vm305, %v304, %v301
  %v310 = vrot.slane %v61, 7
  %v311 = vrot.slane %v62, 7
  %v312 = vrot.slane %v63, 7
  %v313 = vrot.slane %v64, 7
  %v314 = vsel %vm305, %v312, %v313
  %v315 = vsel %vm305, %v311, %v312
  %v316 = vsel %vm305, %v310, %v311
  %v317 = vsel %vm305, %v313, %v310
  %v318 = vmul.f32 %v154, %v309
  %v319 = vmul.f32 %v159, %v308
  %v320 = vmul.f32 %v164, %v307
  %v321 = vmul.f32 %v169, %v306
  %v322 = vmul.f32 %v154, %v260
  %v323 = vmul.f32 %v159, %v265
  %v324 = vmul.f32 %v164, %v270
  %v325 = vmul.f32 %v169, %v275
  %v326 = vrot.slane %v260, 1
  %v327 = vrot.slane %v265, 1
  %v328 = vrot.slane %v270, 1
  %v329 = vrot.slane %v275, 1
  %vm330 = vcmp.lt.s32.totalorder %v283, 7
  %v331 = vsel %vm330, %v328, %v329
  %v332 = vsel %vm330, %v327, %v328
  %v333 = vsel %vm330, %v326, %v327
  %v334 = vsel %vm330, %v329, %v326
  %v335 = vrot.slane %v61, 1
  %v336 = vrot.slane %v62, 1
  %v337 = vrot.slane %v63, 1
  %v338 = vrot.slane %v64, 1
  %v339 = vsel %vm330, %v337, %v338
  %v340 = vsel %vm330, %v336, %v337
  %v341 = vsel %vm330, %v335, %v336
  %v342 = vsel %vm330, %v338, %v335
  %v343 = vmul.f32 %v154, %v333
  %v344 = vmul.f32 %v159, %v332
  %v345 = vmul.f32 %v164, %v331
  %v346 = vmul.f32 %v169, %v334
  %v347 = vrot.slane %v260, 2
  %v348 = vrot.slane %v265, 2
  %v349 = vrot.slane %v270, 2
  %v350 = vrot.slane %v275, 2
  %vm351 = vcmp.lt.s32.totalorder %v283, 6
  %v352 = vsel %vm351, %v349, %v350
  %v353 = vsel %vm351, %v348, %v349
  %v354 = vsel %vm351, %v347, %v348
  %v355 = vsel %vm351, %v350, %v347
  %v356 = vrot.slane %v61, 2
  %v357 = vrot.slane %v62, 2
  %v358 = vrot.slane %v63, 2
  %v359 = vrot.slane %v64, 2
  %v360 = vsel %vm351, %v358, %v359
  %v361 = vsel %vm351, %v357, %v358
  %v362 = vsel %vm351, %v356, %v357
  %v363 = vsel %vm351, %v359, %v356
  %v364 = vmul.f32 %v154, %v354
  %v365 = vmul.f32 %v159, %v353
  %v366 = vmul.f32 %v164, %v352
  %v367 = vmul.f32 %v169, %v355
  %372 = vrot.lane.b32.xlu0 %v318, 32
  %v373 = vpop.permute.xlu0 %372
  %374 = vrot.lane.b32.xlu0 %v319, 32
  %v375 = vpop.permute.xlu0 %374
  %376 = vrot.lane.b32.xlu0 %v320, 32
  %v377 = vpop.permute.xlu0 %376
  %378 = vrot.lane.b32.xlu0 %v321, 32
  %v379 = vpop.permute.xlu0 %378
  %388 = vrot.lane.b32.xlu0 %v322, 64
  %v389 = vpop.permute.xlu0 %388
  %390 = vrot.lane.b32.xlu0 %v323, 64
  %v391 = vpop.permute.xlu0 %390
  %392 = vrot.lane.b32.xlu0 %v324, 64
  %v393 = vpop.permute.xlu0 %392
  %394 = vrot.lane.b32.xlu0 %v325, 64
  %v395 = vpop.permute.xlu0 %394
  %404 = vrot.lane.b32.xlu0 %v343, 96
  %v405 = vpop.permute.xlu0 %404
  %406 = vrot.lane.b32.xlu0 %v344, 96
  %v407 = vpop.permute.xlu0 %406
  %408 = vrot.lane.b32.xlu0 %v345, 96
  %v409 = vpop.permute.xlu0 %408
  %410 = vrot.lane.b32.xlu0 %v346, 96
  %v411 = vpop.permute.xlu0 %410
  %vm416 = vcmask 261120
  %v417 = vsel %vm416, %v297, %v373
  %v418 = vsel %vm416, %v298, %v375
  %v419 = vsel %vm416, %v299, %v377
  %v420 = vsel %vm416, %v300, %v379
  %vm421 = vcmask 523264
  %v422 = vsel %vm421, %v417, %v389
  %v423 = vsel %vm421, %v418, %v391
  %v424 = vsel %vm421, %v419, %v393
  %v425 = vsel %vm421, %v420, %v395
  %vm426 = vcmask 785408
  %v427 = vsel %vm426, %v422, %v405
  %v428 = vsel %vm426, %v423, %v407
  %v429 = vsel %vm426, %v424, %v409
  %v430 = vsel %vm426, %v425, %v411
  %435 = vrot.lane.b32.xlu0 %v317, 8
  %v436 = vpop.permute.xlu0 %435
  %437 = vrot.lane.b32.xlu0 %v316, 8
  %v438 = vpop.permute.xlu0 %437
  %439 = vrot.lane.b32.xlu0 %v315, 8
  %v440 = vpop.permute.xlu0 %439
  %441 = vrot.lane.b32.xlu0 %v314, 8
  %v442 = vpop.permute.xlu0 %441
  %451 = vrot.lane.b32.xlu0 %v61, 16
  %v452 = vpop.permute.xlu0 %451
  %453 = vrot.lane.b32.xlu0 %v62, 16
  %v454 = vpop.permute.xlu0 %453
  %455 = vrot.lane.b32.xlu0 %v63, 16
  %v456 = vpop.permute.xlu0 %455
  %457 = vrot.lane.b32.xlu0 %v64, 16
  %v458 = vpop.permute.xlu0 %457
  %467 = vrot.lane.b32.xlu0 %v341, 24
  %v468 = vpop.permute.xlu0 %467
  %469 = vrot.lane.b32.xlu0 %v340, 24
  %v470 = vpop.permute.xlu0 %469
  %471 = vrot.lane.b32.xlu0 %v339, 24
  %v472 = vpop.permute.xlu0 %471
  %473 = vrot.lane.b32.xlu0 %v342, 24
  %v474 = vpop.permute.xlu0 %473
  %483 = vrot.lane.b32.xlu0 %v362, 32
  %v484 = vpop.permute.xlu0 %483
  %485 = vrot.lane.b32.xlu0 %v361, 32
  %v486 = vpop.permute.xlu0 %485
  %487 = vrot.lane.b32.xlu0 %v360, 32
  %v488 = vpop.permute.xlu0 %487
  %489 = vrot.lane.b32.xlu0 %v363, 32
  %v490 = vpop.permute.xlu0 %489
  %vm495 = vcmask 64512
  %v496 = vsel %vm495, %v296, %v436
  %v497 = vsel %vm495, %v295, %v438
  %v498 = vsel %vm495, %v294, %v440
  %v499 = vsel %vm495, %v293, %v442
  %v500 = vsel %vm74, %v496, %v452
  %v501 = vsel %vm74, %v497, %v454
  %v502 = vsel %vm74, %v498, %v456
  %v503 = vsel %vm74, %v499, %v458
  %vm504 = vcmask 195584
  %v505 = vsel %vm504, %v500, %v468
  %v506 = vsel %vm504, %v501, %v470
  %v507 = vsel %vm504, %v502, %v472
  %v508 = vsel %vm504, %v503, %v474
  %v509 = vsel %vm416, %v505, %v484
  %v510 = vsel %vm416, %v506, %v486
  %v511 = vsel %vm416, %v507, %v488
  %v512 = vsel %vm416, %v508, %v490
  %v513 = vld [vmem:[%s11] sm:$0xff]
  %v514 = vld [vmem:[%s11 + $0x8] sm:$0xff]
  %v515 = vld [vmem:[%s11 + $0x10] sm:$0xff]
  %v516 = vld [vmem:[%s11 + $0x18] sm:$0xff]
  %v517 = vld [vmem:[%s11 + $0x20] sm:$0xff]
  %v518 = vld [vmem:[%s11 + $0x28] sm:$0xff]
  %v519 = vld [vmem:[%s11 + $0x30] sm:$0xff]
  %v520 = vld [vmem:[%s11 + $0x38] sm:$0xff]
  %v521 = vld [vmem:[%s11 + $0x40] sm:$0xff]
  %v522 = vld [vmem:[%s11 + $0x48] sm:$0xff]
  %v523 = vld [vmem:[%s11 + $0x50] sm:$0xff]
  %v524 = vld [vmem:[%s11 + $0x58] sm:$0xff]
  %v525 = vld [vmem:[%s11 + $0x60] sm:$0xff]
  %v526 = vld [vmem:[%s11 + $0x68] sm:$0xff]
  %v527 = vld [vmem:[%s11 + $0x70] sm:$0xff]
  %v528 = vld [vmem:[%s11 + $0x78] sm:$0xff]
  %v529 = vld [vmem:[%s11 + $0x80] sm:$0xff]
  %v530 = vld [vmem:[%s11 + $0x88] sm:$0xff]
  %v531 = vld [vmem:[%s11 + $0x90] sm:$0xff]
  %v532 = vld [vmem:[%s11 + $0x98] sm:$0xff]
  %v534 = vsel %vm416, %v364, 0
  %v537 = vsel %vm416, %v365, 0
  %v540 = vsel %vm416, %v366, 0
  %v543 = vsel %vm416, %v367, 0
  %545 = vmatprep.subr.mxu0 0.0
  %546 = vmatpush1.msra.mxu0 %v528
  %547 = vmatprep.subr.mxu0 0.0
  %548 = vmatpush1.msra.mxu0 %v527
  %549 = vmatprep.subr.mxu0 0.0
  %550 = vmatpush1.msra.mxu0 %v526
  %551 = vmatprep.subr.mxu0 0.0
  %552 = vmatpush1.msra.mxu0 %v525
  %553 = vmatprep.subr.mxu0 0.0
  %554 = vmatpush1.msra.mxu0 %v524
  %555 = vmatprep.subr.mxu0 0.0
  %556 = vmatpush1.msra.mxu0 %v523
  %557 = vmatprep.subr.mxu0 0.0
  %558 = vmatpush1.msra.mxu0 %v522
  %559 = vmatprep.subr.mxu0 0.0
  %560 = vmatpush1.msra.mxu0 %v521
  %561 = vmatprep.subr.mxu0 0.0
  %562 = vmatpush1.msra.mxu0 %v520
  %563 = vmatprep.subr.mxu0 0.0
  %564 = vmatpush1.msra.mxu0 %v519
  %565 = vmatprep.subr.mxu0 0.0
  %566 = vmatpush1.msra.mxu0 %v518
  %567 = vmatprep.subr.mxu0 0.0
  %568 = vmatpush1.msra.mxu0 %v517
  %569 = vmatprep.subr.mxu0 0.0
  %570 = vmatpush1.msra.mxu0 %v516
  %571 = vmatprep.subr.mxu0 0.0
  %572 = vmatpush1.msra.mxu0 %v515
  %573 = vmatprep.subr.mxu0 0.0
  %574 = vmatpush1.msra.mxu0 %v514
  %575 = vmatprep.subr.mxu0 0.0
  %576 = vmatpush1.msra.mxu0 %v513
  %577 = vmatprep.subr.mxu0 0.0
  %578 = vmatpush2.msra.mxu0 0.0
  %579 = vmatprep.subr.mxu0 0.0
  %580 = vmatpush2.msra.mxu0 0.0
  %581 = vmatprep.subr.mxu0 0.0
  %582 = vmatpush2.msra.mxu0 0.0
  %583 = vmatprep.subr.mxu0 0.0
  %584 = vmatpush2.msra.mxu0 0.0
  %585 = vmatprep.subr.mxu0 0.0
  %586 = vmatpush2.msra.mxu0 0.0
  %587 = vmatprep.subr.mxu0 0.0
  %588 = vmatpush2.msra.mxu0 0.0
  %589 = vmatprep.subr.mxu0 0.0
  %590 = vmatpush2.msra.mxu0 0.0
  %591 = vmatprep.subr.mxu0 0.0
  %592 = vmatpush2.msra.mxu0 0.0
  %593 = vmatprep.subr.mxu0 0.0
  %594 = vmatpush2.msra.mxu0 0.0
  %595 = vmatprep.subr.mxu0 0.0
  %596 = vmatpush2.msra.mxu0 0.0
  %597 = vmatprep.subr.mxu0 0.0
  %598 = vmatpush2.msra.mxu0 0.0
  %599 = vmatprep.subr.mxu0 0.0
  %600 = vmatpush2.msra.mxu0 0.0
  %601 = vmatprep.subr.mxu0 0.0
  %602 = vmatpush2.msra.mxu0 %v532
  %603 = vmatprep.subr.mxu0 0.0
  %604 = vmatpush2.msra.mxu0 %v531
  %605 = vmatprep.subr.mxu0 0.0
  %606 = vmatpush2.msra.mxu0 %v530
  %607 = vmatprep.subr.mxu0 0.0
  %608 = vmatpush2.msra.mxu0 %v529
  %609 = vmatprep.mubr.f32.mxu0 %v534
  %610 = vmatmul.mubr.f32.gmra.mxu0 %v427
  %v611 = vpop.f32.mrf.mxu0
  %v612 = vadd.f32 0.0, %v611
  %v613 = vpop.f32.mrf.mxu0
  %614 = vmatprep.mubr.f32.mxu0 %v537
  %615 = vmatmul.mubr.f32.gmra.mxu0 %v428
  %v616 = vpop.f32.mrf.mxu0
  %v617 = vadd.f32 0.0, %v616
  %v618 = vpop.f32.mrf.mxu0
  %619 = vmatprep.mubr.f32.mxu0 %v540
  %620 = vmatmul.mubr.f32.gmra.mxu0 %v429
  %v621 = vpop.f32.mrf.mxu0
  %v622 = vadd.f32 0.0, %v621
  %v623 = vpop.f32.mrf.mxu0
  %624 = vmatprep.mubr.f32.mxu0 %v543
  %625 = vmatmul.mubr.f32.gmra.mxu0 %v430
  %v626 = vpop.f32.mrf.mxu0
  %v627 = vadd.f32 0.0, %v626
  %v628 = vpop.f32.mrf.mxu0
  %629 = vdwg.mxu0
  %v630 = vld [vmem:[%s7] sm:$0x1]
  %v632 = vlaneseq
  %v633 = vshrl.u32 %v632, 7
  %v634 = vsub.s32 0, %v633
  %v635 = vrot.slane %v630, %v634
  %v637 = vmul.f32 %v612, %v635
  %v638 = vmul.f32 %v617, %v635
  %v639 = vmul.f32 %v622, %v635
  %v640 = vmul.f32 %v627, %v635
  %v641 = vld [vmem:[%s8] sm:$0x1]
  %v643 = vlaneseq
  %v644 = vshrl.u32 %v643, 7
  %v645 = vsub.s32 0, %v644
  %v646 = vrot.slane %v641, %v645
  %v648 = vadd.f32 %v637, %v646
  %v649 = vadd.f32 %v638, %v646
  %v650 = vadd.f32 %v639, %v646
  %v651 = vadd.f32 %v640, %v646
  %v652 = vtanh.pop %v648
  %v653 = vtanh.pop %v649
  %v654 = vtanh.pop %v650
  %v655 = vtanh.pop %v651
  %v656 = vld [vmem:[%s9] sm:$0xff]
  %v657 = vld [vmem:[%s9 + $0x8] sm:$0xff]
  %v658 = vld [vmem:[%s9 + $0x10] sm:$0xff]
  %v659 = vld [vmem:[%s9 + $0x18] sm:$0xff]
  %v660 = vmul.f32 %v652, %v656
  %v661 = vmul.f32 %v653, %v657
  %v662 = vmul.f32 %v654, %v658
  %v663 = vmul.f32 %v655, %v659
  %v664 = vld [vmem:[%s10] sm:$0xff]
  %v665 = vld [vmem:[%s10 + $0x8] sm:$0xff]
  %v666 = vld [vmem:[%s10 + $0x10] sm:$0xff]
  %v667 = vld [vmem:[%s10 + $0x18] sm:$0xff]
  %v668 = vadd.f32 %v660, %v664
  %v669 = vadd.f32 %v661, %v665
  %v670 = vadd.f32 %v662, %v666
  %v671 = vadd.f32 %v663, %v667
  %v672 = vld [vmem:[%s12] sm:$0xff]
  %v673 = vld [vmem:[%s12 + $0x8] sm:$0xff]
  %v674 = vld [vmem:[%s12 + $0x10] sm:$0xf]
  %vm675 = vcmask 162816
  %v677 = vsel %vm675, %v668, 0
  %v680 = vsel %vm675, %v669, 0
  %v683 = vsel %vm675, %v670, 0
  %v686 = vsel %vm675, %v671, 0
  %vm688 = vcmask 1043456
  %v690 = vsel %vm688, %v674, 0
  %692 = vmatprep.subr.mxu0 0.0
  %693 = vmatpush1.msra.mxu0 0.0
  %694 = vmatprep.subr.mxu0 0.0
  %695 = vmatpush1.msra.mxu0 0.0
  %696 = vmatprep.subr.mxu0 0.0
  %697 = vmatpush1.msra.mxu0 0.0
  %698 = vmatprep.subr.mxu0 0.0
  %699 = vmatpush1.msra.mxu0 0.0
  %700 = vmatprep.subr.mxu0 0.0
  %701 = vmatpush1.msra.mxu0 0.0
  %702 = vmatprep.subr.mxu0 0.0
  %703 = vmatpush1.msra.mxu0 0.0
  %704 = vmatprep.subr.mxu0 0.0
  %705 = vmatpush1.msra.mxu0 0.0
  %706 = vmatprep.subr.mxu0 0.0
  %707 = vmatpush1.msra.mxu0 0.0
  %708 = vmatprep.subr.mxu0 0.0
  %709 = vmatpush1.msra.mxu0 0.0
  %710 = vmatprep.subr.mxu0 0.0
  %711 = vmatpush1.msra.mxu0 0.0
  %712 = vmatprep.subr.mxu0 0.0
  %713 = vmatpush1.msra.mxu0 0.0
  %714 = vmatprep.subr.mxu0 0.0
  %715 = vmatpush1.msra.mxu0 0.0
  %716 = vmatprep.subr.mxu0 0.0
  %717 = vmatpush1.msra.mxu0 0.0
  %718 = vmatprep.subr.mxu0 0.0
  %719 = vmatpush1.msra.mxu0 %v690
  %720 = vmatprep.subr.mxu0 0.0
  %721 = vmatpush1.msra.mxu0 %v673
  %722 = vmatprep.subr.mxu0 0.0
  %723 = vmatpush1.msra.mxu0 %v672
  %724 = vmatprep.subr.mxu0 0.0
  %725 = vmatpush2.msra.mxu0 0.0
  %726 = vmatprep.subr.mxu0 0.0
  %727 = vmatpush2.msra.mxu0 0.0
  %728 = vmatprep.subr.mxu0 0.0
  %729 = vmatpush2.msra.mxu0 0.0
  %730 = vmatprep.subr.mxu0 0.0
  %731 = vmatpush2.msra.mxu0 0.0
  %732 = vmatprep.subr.mxu0 0.0
  %733 = vmatpush2.msra.mxu0 0.0
  %734 = vmatprep.subr.mxu0 0.0
  %735 = vmatpush2.msra.mxu0 0.0
  %736 = vmatprep.subr.mxu0 0.0
  %737 = vmatpush2.msra.mxu0 0.0
  %738 = vmatprep.subr.mxu0 0.0
  %739 = vmatpush2.msra.mxu0 0.0
  %740 = vmatprep.subr.mxu0 0.0
  %741 = vmatpush2.msra.mxu0 0.0
  %742 = vmatprep.subr.mxu0 0.0
  %743 = vmatpush2.msra.mxu0 0.0
  %744 = vmatprep.subr.mxu0 0.0
  %745 = vmatpush2.msra.mxu0 0.0
  %746 = vmatprep.subr.mxu0 0.0
  %747 = vmatpush2.msra.mxu0 0.0
  %748 = vmatprep.subr.mxu0 0.0
  %749 = vmatpush2.msra.mxu0 0.0
  %750 = vmatprep.subr.mxu0 0.0
  %751 = vmatpush2.msra.mxu0 0.0
  %752 = vmatprep.subr.mxu0 0.0
  %753 = vmatpush2.msra.mxu0 0.0
  %754 = vmatprep.subr.mxu0 0.0
  %755 = vmatpush2.msra.mxu0 0.0
  %756 = vmatprep.mubr.f32.mxu0 0.0
  %757 = vmatmul.mubr.f32.gmra.mxu0 %v677
  %v758 = vpop.f32.mrf.mxu0
  %v759 = vadd.f32 0.0, %v758
  %v760 = vpop.f32.mrf.mxu0
  %761 = vmatprep.mubr.f32.mxu0 0.0
  %762 = vmatmul.mubr.f32.gmra.mxu0 %v680
  %v763 = vpop.f32.mrf.mxu0
  %v764 = vadd.f32 0.0, %v763
  %v765 = vpop.f32.mrf.mxu0
  %766 = vmatprep.mubr.f32.mxu0 0.0
  %767 = vmatmul.mubr.f32.gmra.mxu0 %v683
  %v768 = vpop.f32.mrf.mxu0
  %v769 = vadd.f32 0.0, %v768
  %v770 = vpop.f32.mrf.mxu0
  %771 = vmatprep.mubr.f32.mxu0 0.0
  %772 = vmatmul.mubr.f32.gmra.mxu0 %v686
  %v773 = vpop.f32.mrf.mxu0
  %v774 = vadd.f32 0.0, %v773
  %v775 = vpop.f32.mrf.mxu0
  %776 = vdwg.mxu0
  %v777 = vld [vmem:[%s15] sm:$0xff]
  %v778 = vld [vmem:[%s15 + $0x8] sm:$0xff]
  %v779 = vld [vmem:[%s15 + $0x10] sm:$0xff]
  %v780 = vld [vmem:[%s15 + $0x18] sm:$0xff]
  %v781 = vld [vmem:[%s15 + $0x20] sm:$0xff]
  %v782 = vld [vmem:[%s13] sm:$0xff]
  %v783 = vld [vmem:[%s13 + $0x8] sm:$0xff]
  %v784 = vld [vmem:[%s13 + $0x10] sm:$0xf]
  %v785 = vld [vmem:[%s14] sm:$0xff]
  %v786 = vld [vmem:[%s14 + $0x8] sm:$0xff]
  %v787 = vld [vmem:[%s14 + $0x10] sm:$0xf]
  %v788 = vsub.f32 %v782, %v785
  %v789 = vsub.f32 %v783, %v786
  %v790 = vsub.f32 %v784, %v787
  %v792 = vsel %vm688, %v790, 0
  %794 = vmatprep.subr.mxu0 0.0
  %795 = vmatpush1.msra.mxu0 0.0
  %796 = vmatprep.subr.mxu0 0.0
  %797 = vmatpush1.msra.mxu0 0.0
  %798 = vmatprep.subr.mxu0 0.0
  %799 = vmatpush1.msra.mxu0 0.0
  %800 = vmatprep.subr.mxu0 0.0
  %801 = vmatpush1.msra.mxu0 0.0
  %802 = vmatprep.subr.mxu0 0.0
  %803 = vmatpush1.msra.mxu0 0.0
  %804 = vmatprep.subr.mxu0 0.0
  %805 = vmatpush1.msra.mxu0 0.0
  %806 = vmatprep.subr.mxu0 0.0
  %807 = vmatpush1.msra.mxu0 0.0
  %808 = vmatprep.subr.mxu0 0.0
  %809 = vmatpush1.msra.mxu0 0.0
  %810 = vmatprep.subr.mxu0 0.0
  %811 = vmatpush1.msra.mxu0 0.0
  %812 = vmatprep.subr.mxu0 0.0
  %813 = vmatpush1.msra.mxu0 0.0
  %814 = vmatprep.subr.mxu0 0.0
  %815 = vmatpush1.msra.mxu0 0.0
  %816 = vmatprep.subr.mxu0 0.0
  %817 = vmatpush1.msra.mxu0 0.0
  %818 = vmatprep.subr.mxu0 0.0
  %819 = vmatpush1.msra.mxu0 0.0
  %820 = vmatprep.subr.mxu0 0.0
  %821 = vmatpush1.msra.mxu0 %v792
  %822 = vmatprep.subr.mxu0 0.0
  %823 = vmatpush1.msra.mxu0 %v789
  %824 = vmatprep.subr.mxu0 0.0
  %825 = vmatpush1.msra.mxu0 %v788
  %826 = vmatprep.subr.mxu0 0.0
  %827 = vmatpush2.msra.mxu0 0.0
  %828 = vmatprep.subr.mxu0 0.0
  %829 = vmatpush2.msra.mxu0 0.0
  %830 = vmatprep.subr.mxu0 0.0
  %831 = vmatpush2.msra.mxu0 0.0
  %832 = vmatprep.subr.mxu0 0.0
  %833 = vmatpush2.msra.mxu0 0.0
  %834 = vmatprep.subr.mxu0 0.0
  %835 = vmatpush2.msra.mxu0 0.0
  %836 = vmatprep.subr.mxu0 0.0
  %837 = vmatpush2.msra.mxu0 0.0
  %838 = vmatprep.subr.mxu0 0.0
  %839 = vmatpush2.msra.mxu0 0.0
  %840 = vmatprep.subr.mxu0 0.0
  %841 = vmatpush2.msra.mxu0 0.0
  %842 = vmatprep.subr.mxu0 0.0
  %843 = vmatpush2.msra.mxu0 0.0
  %844 = vmatprep.subr.mxu0 0.0
  %845 = vmatpush2.msra.mxu0 0.0
  %846 = vmatprep.subr.mxu0 0.0
  %847 = vmatpush2.msra.mxu0 0.0
  %848 = vmatprep.subr.mxu0 0.0
  %849 = vmatpush2.msra.mxu0 0.0
  %850 = vmatprep.subr.mxu0 0.0
  %851 = vmatpush2.msra.mxu0 0.0
  %852 = vmatprep.subr.mxu0 0.0
  %853 = vmatpush2.msra.mxu0 0.0
  %854 = vmatprep.subr.mxu0 0.0
  %855 = vmatpush2.msra.mxu0 0.0
  %856 = vmatprep.subr.mxu0 0.0
  %857 = vmatpush2.msra.mxu0 0.0
  %858 = vmatprep.mubr.f32.mxu0 0.0
  %859 = vmatmul.mubr.f32.gmra.mxu0 %v677
  %v860 = vpop.f32.mrf.mxu0
  %v861 = vadd.f32 0.0, %v860
  %v862 = vpop.f32.mrf.mxu0
  %863 = vmatprep.mubr.f32.mxu0 0.0
  %864 = vmatmul.mubr.f32.gmra.mxu0 %v680
  %v865 = vpop.f32.mrf.mxu0
  %v866 = vadd.f32 0.0, %v865
  %v867 = vpop.f32.mrf.mxu0
  %868 = vmatprep.mubr.f32.mxu0 0.0
  %869 = vmatmul.mubr.f32.gmra.mxu0 %v683
  %v870 = vpop.f32.mrf.mxu0
  %v871 = vadd.f32 0.0, %v870
  %v872 = vpop.f32.mrf.mxu0
  %873 = vmatprep.mubr.f32.mxu0 0.0
  %874 = vmatmul.mubr.f32.gmra.mxu0 %v686
  %v875 = vpop.f32.mrf.mxu0
  %v876 = vadd.f32 0.0, %v875
  %v877 = vpop.f32.mrf.mxu0
  %878 = vdwg.mxu0
  %v879 = vmul.f32 %v861, %v509
  %v880 = vmul.f32 %v866, %v510
  %v881 = vmul.f32 %v871, %v511
  %v882 = vmul.f32 %v876, %v512
  %vm883 = vcmask 326656
  %v885 = vsel %vm883, %v879, 0
  %v888 = vsel %vm883, %v880, 0
  %v891 = vsel %vm883, %v881, 0
  %v894 = vsel %vm883, %v882, 0
  %896 = vmatprep.subr.mxu0 0.0
  %897 = vmatpush1.msra.mxu0 0.0
  %898 = vmatprep.subr.mxu0 0.0
  %899 = vmatpush1.msra.mxu0 0.0
  %900 = vmatprep.subr.mxu0 0.0
  %901 = vmatpush1.msra.mxu0 0.0
  %902 = vmatprep.subr.mxu0 0.0
  %903 = vmatpush1.msra.mxu0 0.0
  %904 = vmatprep.subr.mxu0 0.0
  %905 = vmatpush1.msra.mxu0 0.0
  %906 = vmatprep.subr.mxu0 0.0
  %907 = vmatpush1.msra.mxu0 0.0
  %908 = vmatprep.subr.mxu0 0.0
  %909 = vmatpush1.msra.mxu0 0.0
  %910 = vmatprep.subr.mxu0 0.0
  %911 = vmatpush1.msra.mxu0 0.0
  %912 = vmatprep.subr.mxu0 0.0
  %913 = vmatpush1.msra.mxu0 0.0
  %914 = vmatprep.subr.mxu0 0.0
  %915 = vmatpush1.msra.mxu0 0.0
  %916 = vmatprep.subr.mxu0 0.0
  %917 = vmatpush1.msra.mxu0 0.0
  %918 = vmatprep.subr.mxu0 0.0
  %919 = vmatpush1.msra.mxu0 %v781
  %920 = vmatprep.subr.mxu0 0.0
  %921 = vmatpush1.msra.mxu0 %v780
  %922 = vmatprep.subr.mxu0 0.0
  %923 = vmatpush1.msra.mxu0 %v779
  %924 = vmatprep.subr.mxu0 0.0
  %925 = vmatpush1.msra.mxu0 %v778
  %926 = vmatprep.subr.mxu0 0.0
  %927 = vmatpush1.msra.mxu0 %v777
  %928 = vmatprep.subr.mxu0 0.0
  %929 = vmatpush2.msra.mxu0 0.0
  %930 = vmatprep.subr.mxu0 0.0
  %931 = vmatpush2.msra.mxu0 0.0
  %932 = vmatprep.subr.mxu0 0.0
  %933 = vmatpush2.msra.mxu0 0.0
  %934 = vmatprep.subr.mxu0 0.0
  %935 = vmatpush2.msra.mxu0 0.0
  %936 = vmatprep.subr.mxu0 0.0
  %937 = vmatpush2.msra.mxu0 0.0
  %938 = vmatprep.subr.mxu0 0.0
  %939 = vmatpush2.msra.mxu0 0.0
  %940 = vmatprep.subr.mxu0 0.0
  %941 = vmatpush2.msra.mxu0 0.0
  %942 = vmatprep.subr.mxu0 0.0
  %943 = vmatpush2.msra.mxu0 0.0
  %944 = vmatprep.subr.mxu0 0.0
  %945 = vmatpush2.msra.mxu0 0.0
  %946 = vmatprep.subr.mxu0 0.0
  %947 = vmatpush2.msra.mxu0 0.0
  %948 = vmatprep.subr.mxu0 0.0
  %949 = vmatpush2.msra.mxu0 0.0
  %950 = vmatprep.subr.mxu0 0.0
  %951 = vmatpush2.msra.mxu0 0.0
  %952 = vmatprep.subr.mxu0 0.0
  %953 = vmatpush2.msra.mxu0 0.0
  %954 = vmatprep.subr.mxu0 0.0
  %955 = vmatpush2.msra.mxu0 0.0
  %956 = vmatprep.subr.mxu0 0.0
  %957 = vmatpush2.msra.mxu0 0.0
  %958 = vmatprep.subr.mxu0 0.0
  %959 = vmatpush2.msra.mxu0 0.0
  %960 = vmatprep.mubr.f32.mxu0 0.0
  %961 = vmatmul.mubr.f32.gmra.mxu0 %v885
  %v962 = vpop.f32.mrf.mxu0
  %v963 = vadd.f32 0.0, %v962
  %v964 = vpop.f32.mrf.mxu0
  %965 = vmatprep.mubr.f32.mxu0 0.0
  %966 = vmatmul.mubr.f32.gmra.mxu0 %v888
  %v967 = vpop.f32.mrf.mxu0
  %v968 = vadd.f32 0.0, %v967
  %v969 = vpop.f32.mrf.mxu0
  %970 = vmatprep.mubr.f32.mxu0 0.0
  %971 = vmatmul.mubr.f32.gmra.mxu0 %v891
  %v972 = vpop.f32.mrf.mxu0
  %v973 = vadd.f32 0.0, %v972
  %v974 = vpop.f32.mrf.mxu0
  %975 = vmatprep.mubr.f32.mxu0 0.0
  %976 = vmatmul.mubr.f32.gmra.mxu0 %v894
  %v977 = vpop.f32.mrf.mxu0
  %v978 = vadd.f32 0.0, %v977
  %v979 = vpop.f32.mrf.mxu0
  %980 = vdwg.mxu0
  %985 = vrot.lane.b32.xlu0 %v963, 20
  %v986 = vpop.permute.xlu0 %985
  %987 = vrot.lane.b32.xlu0 %v968, 20
  %v988 = vpop.permute.xlu0 %987
  %989 = vrot.lane.b32.xlu0 %v973, 20
  %v990 = vpop.permute.xlu0 %989
  %991 = vrot.lane.b32.xlu0 %v978, 20
  %v992 = vpop.permute.xlu0 %991
  %v997 = vsel %vm675, %v759, %v986
  %v998 = vsel %vm675, %v764, %v988
  %v999 = vsel %vm675, %v769, %v990
  %v1000 = vsel %vm675, %v774, %v992
  %1001 = vst [vmem:[%s16] sm:$0xff] %v997
  %1002 = vst [vmem:[%s16 + $0x8] sm:$0xff] %v998
  %1003 = vst [vmem:[%s16 + $0x10] sm:$0xff] %v999
  %1004 = vst [vmem:[%s16 + $0x18] sm:$0xff] %v1000
  // Predicated region
  $region66: #{operation_on_attention_layers.1} parent=0 // pred_check
    _
  $region67: #{operation_on_attention_layers.1} parent=0 // pred_check_branch
    %1006 = sbr.rel (0) target = $region69
  $region68: #{operation_on_attention_layers.1} parent=0 // pred_region
    _
  $region69: #{operation_on_attention_layers.1} parent=0 // pred_fallthru
    _
  // Predicated region
  $region70: #{operation_on_attention_layers.1} parent=0 // pred_check
    _
  $region71: #{operation_on_attention_layers.1} parent=0 // pred_check_branch
    %1008 = sbr.rel (0) target = $region73
  $region72: #{operation_on_attention_layers.1} parent=0 // pred_region
    _
  $region73: #{operation_on_attention_layers.1} parent=0 // pred_fallthru
    _

</llo_original>
